<compile_context>
chip_gen: v7x
topology: tpu7x:2x2x1
jax: 0.10.0
libtpu: 0.0.40
codegen_flags: <defaults>
</compile_context>

<pallas_src>
import functools
import math

import jax
import jax.numpy as jnp
from jax.experimental import pallas as pl
from jax.experimental.pallas import tpu as pltpu


_TILE_BUDGET_BYTES = 4 * 1024 * 1024   # per-operand tile budget (review: 4 MiB, v7x-safe)
_VMEM_FLOOR_BYTES = 16 * 1024 * 1024
_VMEM_CEIL_BYTES = 48 * 1024 * 1024    # <= 64 MiB physical on v7x with headroom


def _round_up(v: int, m: int) -> int:
    return ((v + m - 1) // m) * m


def _round_down(v: int, m: int) -> int:
    return (v // m) * m


def _vmem_limit(tile_bytes_total: int) -> int:
    # double-buffered tiles + headroom, clamped to a range safe on v5e/v6e/v7x
    limit = 2 * tile_bytes_total + (4 << 20)
    return int(min(max(limit, _VMEM_FLOOR_BYTES), _VMEM_CEIL_BYTES))


def _make_pe(d_model: int, max_seq_length: int) -> jnp.ndarray:
    """Sinusoidal positional-encoding buffer, shape (max_seq_length, d_model), f32.

    Matches the PyTorch module; like the PyTorch code, requires even d_model.
    """
    assert d_model % 2 == 0, "PositionalEncoding requires an even d_model (matches PyTorch)"
    position = jnp.arange(max_seq_length, dtype=jnp.float32)[:, None]            # (L, 1)
    div_term = jnp.exp(
        jnp.arange(0, d_model, 2, dtype=jnp.float32) * (-math.log(10000.0) / d_model)
    )                                                                             # (D/2,)
    angles = position * div_term                                                  # (L, D/2)
    pe = jnp.zeros((max_seq_length, d_model), dtype=jnp.float32)
    pe = pe.at[:, 0::2].set(jnp.sin(angles))
    pe = pe.at[:, 1::2].set(jnp.cos(angles))
    return pe


# ----------------------------- kernel bodies -----------------------------

def _add_pe_seq_kernel(x_ref, pe_ref, o_ref):
    # x_ref/o_ref: (TS, TD) (batch dim squeezed); pe_ref: (TS, TD). Plain lane-dense add.
    o_ref[...] = x_ref[...] + pe_ref[...]


def _add_pe_batch_kernel(x_ref, pe_ref, o_ref, *, seq_len):
    # x_ref/o_ref: (TB, S, D); pe_ref: (TS_pe, D) with TS_pe >= S, reused across the grid.
    o_ref[...] = x_ref[...] + pe_ref[:seq_len, :][None, :, :]


def _add_pe_flat_kernel(x_ref, pe_ref, o_ref):
    # x_ref/o_ref: (TB, TF) lane-dense slab; pe_ref: (1, TF), broadcast over the batch rows.
    o_ref[...] = x_ref[...] + pe_ref[...]


# ----------------------------- wrapper -----------------------------

def positional_encoding(x: jnp.ndarray, pe: jnp.ndarray, *, donate_x: bool = False) -> jnp.ndarray:
    """x: (B, S, D); pe: (max_seq, D) with max_seq >= S. Returns x + pe[:S] broadcast over B.

    donate_x: only set True when the caller genuinely donates x's buffer; otherwise XLA
    copy-insertion duplicates x and the aliased path is slower than out-of-place.
    """
    B, S, D = x.shape
    max_seq = pe.shape[0]
    assert max_seq >= S, "pe buffer shorter than sequence"
    pe = pe.astype(x.dtype)  # one-time cast outside the kernel

    itemsize = jnp.dtype(x.dtype).itemsize
    sub_align = 8 if itemsize >= 4 else (16 if itemsize == 2 else 32)  # sublane packing rows

    io_alias = {0: 0} if donate_x else {}
    cost = pl.CostEstimate(
        flops=B * S * D,
        transcendentals=0,
        bytes_accessed=(2 * B * S * D + S * D) * itemsize,
    )

    if D >= 128:
        slab_bytes = S * D * itemsize

        if slab_bytes <= _TILE_BUDGET_BYTES and B > 1:
            # --- batch-tiled path: per-batch slab is small, fill the budget across batch ---
            TB = max(1, min(B, _TILE_BUDGET_BYTES // slab_bytes))
            # pe block rows: multiple of sub_align (or full buffer) to satisfy (8,128) tiling
            if S % sub_align == 0 or S == max_seq:
                TS_pe = S
            else:
                TS_pe = min(max_seq, _round_up(S, sub_align))
            tile_total = (2 * TB * S * D + TS_pe * D) * itemsize
            grid = (pl.cdiv(B, TB),)

            return pl.pallas_call(
                functools.partial(_add_pe_batch_kernel, seq_len=S),
                out_shape=jax.ShapeDtypeStruct((B, S, D), x.dtype),
                grid_spec=pltpu.PrefetchScalarGridSpec(
                    num_scalar_prefetch=0,
                    grid=grid,
                    in_specs=[
                        pl.BlockSpec((TB, S, D), lambda b: (b, 0, 0)),
                        # one (TS_pe, D) pe block, DMA'd once and reused over the whole grid
                        pl.BlockSpec((TS_pe, D), lambda b: (0, 0)),
                    ],
                    out_specs=pl.BlockSpec((TB, S, D), lambda b: (b, 0, 0)),
                ),
                compiler_params=pltpu.CompilerParams(
                    dimension_semantics=("parallel",),
                    vmem_limit_bytes=_vmem_limit(tile_total),
                ),
                cost_estimate=cost,
                input_output_aliases=io_alias,
            )(x, pe)

        # --- S-tiled path (big per-batch slabs or B == 1): keep TD = D (contiguous DMA) ---
        if D * itemsize * sub_align <= _TILE_BUDGET_BYTES:
            TD = D
        else:
            # only split D when D alone blows the budget; keep TD a multiple of 128
            TD = max(128, _round_down(_TILE_BUDGET_BYTES // (sub_align * itemsize), 128))
        rows_budget = max(sub_align, _TILE_BUDGET_BYTES // (TD * itemsize))
        TS = max(sub_align, _round_down(rows_budget, sub_align))
        TS = min(TS, _round_up(S, sub_align))
        grid = (pl.cdiv(S, TS), pl.cdiv(D, TD), B)  # batch innermost -> pe tile reused over B
        tile_total = 3 * TS * TD * itemsize

        return pl.pallas_call(
            _add_pe_seq_kernel,
            out_shape=jax.ShapeDtypeStruct((B, S, D), x.dtype),
            grid_spec=pltpu.PrefetchScalarGridSpec(
                num_scalar_prefetch=0,
                grid=grid,
                in_specs=[
                    pl.BlockSpec((pl.Squeezed(), TS, TD), lambda s, d, b: (b, s, d)),
                    pl.BlockSpec((TS, TD), lambda s, d, b: (s, d)),
                ],
                out_specs=pl.BlockSpec((pl.Squeezed(), TS, TD), lambda s, d, b: (b, s, d)),
            ),
            compiler_params=pltpu.CompilerParams(
                dimension_semantics=("parallel", "parallel", "parallel"),
                vmem_limit_bytes=_vmem_limit(tile_total),
            ),
            cost_estimate=cost,
            input_output_aliases=io_alias,
        )(x, pe)

    # --- small-D path (D < 128): fold D into the lane dim so stores are lane-dense ---
    F = S * D
    F_pad = _round_up(F, 128)                                      # 128-multiple -> unmasked vst
    TF = min(F_pad, max(128, _round_down(_TILE_BUDGET_BYTES // (sub_align * itemsize), 128)))
    TB = min(B, max(1, _TILE_BUDGET_BYTES // (TF * itemsize)))      # grow TB to fill the budget
    if TB < B:
        TB = max(sub_align, _round_down(TB, sub_align))             # sublane-packed block rows
    x2 = x.reshape(B, F)                                            # free collapse (contiguous)
    pe2 = pe.reshape(1, max_seq * D)                                # flat offsets < S*D == pe[:S]
    grid = (pl.cdiv(F, TF), pl.cdiv(B, TB))
    tile_total = (2 * TB * TF + TF) * itemsize

    out2 = pl.pallas_call(
        _add_pe_flat_kernel,
        out_shape=jax.ShapeDtypeStruct((B, F), x.dtype),
        grid_spec=pltpu.PrefetchScalarGridSpec(
            num_scalar_prefetch=0,
            grid=grid,
            in_specs=[
                pl.BlockSpec((TB, TF), lambda f, b: (b, f)),
                pl.BlockSpec((1, TF), lambda f, b: (0, f)),         # reused across the batch axis
            ],
            out_specs=pl.BlockSpec((TB, TF), lambda f, b: (b, f)),
        ),
        compiler_params=pltpu.CompilerParams(
            dimension_semantics=("parallel", "parallel"),
            vmem_limit_bytes=_vmem_limit(tile_total),
        ),
        cost_estimate=cost,
        input_output_aliases=io_alias,
    )(x2, pe2)
    return out2.reshape(B, S, D)


if __name__ == "__main__":
    key = jax.random.PRNGKey(0)
    k1, k2, k3 = jax.random.split(key, 3)
    MAX_SEQ = 64

    # 1) Module-sized demo (d_model < 128 -> lane-folded flat path).
    B, S, D = 2, 8, 32
    x = jax.random.normal(k1, (B, S, D), dtype=jnp.float32)
    pe = _make_pe(D, MAX_SEQ)
    ref = x + pe[None, :S, :]
    out = jax.block_until_ready(positional_encoding(x, pe))
    assert out.shape == (B, S, D)
    assert jnp.allclose(out, ref, atol=1e-6), "mismatch vs reference (flat path)"

    # 2) d_model >= 128, small per-batch slab -> batch-tiled path.
    B2, S2, D2 = 2, 16, 128
    x2 = jax.random.normal(k2, (B2, S2, D2), dtype=jnp.float32)
    pe2 = _make_pe(D2, MAX_SEQ)
    ref2 = x2 + pe2[None, :S2, :]
    out2 = jax.block_until_ready(positional_encoding(x2, pe2))
    assert out2.shape == (B2, S2, D2)
    assert jnp.allclose(out2, ref2, atol=1e-6), "mismatch vs reference (batch-tiled path)"

    # 3) d_model >= 128 with B == 1 -> S-tiled (squeezed-batch) path.
    B3, S3, D3 = 1, 32, 128
    x3 = jax.random.normal(k3, (B3, S3, D3), dtype=jnp.float32)
    pe3 = _make_pe(D3, MAX_SEQ)
    ref3 = x3 + pe3[None, :S3, :]
    out3 = jax.block_until_ready(positional_encoding(x3, pe3))
    assert out3.shape == (B3, S3, D3)
    assert jnp.allclose(out3, ref3, atol=1e-6), "mismatch vs reference (S-tiled path)"

    print("KERNEL_OK")
</pallas_src>

<mosaic_0001>
module attributes {stable_mosaic.version = 11 : i64} {
  func.func @_add_pe_flat_kernel(%arg0: i32, %arg1: i32, %arg2: memref<2x256xf32, #tpu.memory_space<vmem>>, %arg3: memref<1x256xf32, #tpu.memory_space<vmem>>, %arg4: memref<2x256xf32, #tpu.memory_space<vmem>>) attributes {dimension_semantics = [#tpu.dimension_semantics<parallel>, #tpu.dimension_semantics<parallel>], iteration_bounds = array<i64: 1, 1>, scalar_prefetch = 0 : i64, scratch_operands = 0 : i64, tpu.core_type = #tpu.core_type<tc>, window_params = [{transform_indices = @transform_0, window_bounds = array<i64: 2, 256>}, {transform_indices = @transform_1, window_bounds = array<i64: 1, 256>}, {transform_indices = @transform_2, window_bounds = array<i64: 2, 256>}]} {
    %c0 = arith.constant 0 : index
    %c0_0 = arith.constant 0 : index
    %0 = vector.load %arg2[%c0, %c0_0] : memref<2x256xf32, #tpu.memory_space<vmem>>, vector<2x256xf32>
    %c0_1 = arith.constant 0 : index
    %c0_2 = arith.constant 0 : index
    %1 = vector.load %arg3[%c0_1, %c0_2] : memref<1x256xf32, #tpu.memory_space<vmem>>, vector<1x256xf32>
    %2 = vector.broadcast %1 : vector<1x256xf32> to vector<2x256xf32>
    %3 = arith.addf %0, %2 : vector<2x256xf32>
    %c0_3 = arith.constant 0 : index
    %c0_4 = arith.constant 0 : index
    %4 = vector.load %arg4[%c0_3, %c0_4] : memref<2x256xf32, #tpu.memory_space<vmem>>, vector<2x256xf32>
    tpu.vector_store %arg4[%c0_3, %c0_4], %3 {strides = array<i32>} : memref<2x256xf32, #tpu.memory_space<vmem>>, vector<2x256xf32>,
    return
  }
  func.func @transform_0(%arg0: i32, %arg1: i32) -> (i32, i32) {
    %c0_i32 = arith.constant 0 : i32
    return %arg1, %arg0 : i32, i32
  }
  func.func @transform_1(%arg0: i32, %arg1: i32) -> (i32, i32) {
    %c0_i32 = arith.constant 0 : i32
    %c0_i32_0 = arith.constant 0 : i32
    return %c0_i32, %arg0 : i32, i32
  }
  func.func @transform_2(%arg0: i32, %arg1: i32) -> (i32, i32) {
    %c0_i32 = arith.constant 0 : i32
    return %arg1, %arg0 : i32, i32
  }
}

</mosaic_0001>

<llo_original>
// kernel: tpu_custom_call.1
$region0: #{tpu_custom_call.1}
  #allocation0 [shape = 'u32[]', space=smem, size = 0x4, offset = 0x4, fixed_abs, tag = 'smem constant byte address 0x4 - core index']
  #allocation1 [shape = 'u32[144,128]{1,0:T(1,128)}', space=vmem, size = 0x12000, scoped, tag = 'internal scratch']
  %s0 = inlined_call_operand.hbm [shape: f32[2,256], index: 0, kind: input, shape index: {}]
  %s1 = inlined_call_operand.hbm [shape: f32[1,2048], index: 1, kind: input, shape index: {}]
  %s2 = inlined_call_operand.hbm [shape: f32[2,256], index: 2, kind: output, shape index: {}]
  %s3 = sld [smem:[#allocation0]]
  $region26: #{tpu_custom_call.1} parent=0
    _
  %s5 = ssub.s32 1, %s3
  %s6 = scalar_select 0, %s5, %s3
  $region1: #{tpu_custom_call.1} parent=0
    #allocation2 [shape = 'u8[2048]{0}', space=vmem, size = 0x800, scoped, tag = 'input window, operand 0, single buffered']
    #allocation3 [shape = 's32[1]{0}', space=sflag, size = 0x4, scoped, tag = 'scoped memory for tpu_custom_call.1']
    #allocation4 [shape = 's32[1]{0}', space=sflag, size = 0x4, scoped, tag = 'scoped memory for tpu_custom_call.1']
    #allocation5 [shape = 'u8[1024]{0}', space=vmem, size = 0x400, scoped, tag = 'input window, operand 1, single buffered']
    #allocation6 [shape = 's32[1]{0}', space=sflag, size = 0x4, scoped, tag = 'scoped memory for tpu_custom_call.1']
    #allocation7 [shape = 'u8[2048]{0}', space=vmem, size = 0x800, scoped, tag = 'output window, operand 0, single buffered']
    %7 = vsyncpa [#allocation3], 0
    %8 = vsyncpa [#allocation6], 0
    %9 = vsyncpa [#allocation4], 0
    // Predicated region
    $region2: #{tpu_custom_call.1} parent=1 // pred_check
      _
    $region3: #{tpu_custom_call.1} parent=1 // pred_check_branch
      %11 = sbr.rel (0) target = $region5
    $region4: #{tpu_custom_call.1} parent=1 // pred_region
      %s13 = ssub.s32 64, 64
      %14 = vsyncadd [#allocation3], %s13
      %s16 = sshll.u32 [#allocation2], 4
      %s17 = int_to_ptr.vmem [resolvable:$true] %s16
      %19 = dma.hbm_to_vmem [thread:$0]  %s0, 64, %s17, [#allocation3]
    $region5: #{tpu_custom_call.1} parent=1 // pred_fallthru
      _
    // Predicated region
    $region6: #{tpu_custom_call.1} parent=1 // pred_check
      _
    $region7: #{tpu_custom_call.1} parent=1 // pred_check_branch
      %21 = sbr.rel (0) target = $region9
    $region8: #{tpu_custom_call.1} parent=1 // pred_region
      %s23 = ssub.s32 32, 32
      %24 = vsyncadd [#allocation6], %s23
      %s26 = sshll.u32 [#allocation5], 4
      %s27 = int_to_ptr.vmem [resolvable:$true] %s26
      %29 = dma.hbm_to_vmem [thread:$0]  %s1, 32, %s27, [#allocation6]
    $region9: #{tpu_custom_call.1} parent=1 // pred_fallthru
      _
    // Predicated region
    $region10: #{tpu_custom_call.1} parent=1 // pred_check
      _
    $region11: #{tpu_custom_call.1} parent=1 // pred_check_branch
      %31 = sbr.rel (0) target = $region13
    $region12: #{tpu_custom_call.1} parent=1 // pred_region
      %32 = dma.done [#allocation3], 64
    $region13: #{tpu_custom_call.1} parent=1 // pred_fallthru
      _
    // Predicated region
    $region14: #{tpu_custom_call.1} parent=1 // pred_check
      _
    $region15: #{tpu_custom_call.1} parent=1 // pred_check_branch
      %34 = sbr.rel (0) target = $region17
    $region16: #{tpu_custom_call.1} parent=1 // pred_region
      %35 = dma.done [#allocation6], 32
    $region17: #{tpu_custom_call.1} parent=1 // pred_fallthru
      _
    %v36 = vld [vmem:[#allocation2] sm:$0xf]
    %v37 = vld [vmem:[#allocation5] sm:$0x3]
    %v39 = vlaneseq
    %v40 = vshrl.u32 %v39, 7
    %v41 = vsub.s32 0, %v40
    %v42 = vrot.slane %v37, %v41
    %v43 = vlaneseq
    %v44 = vshrl.u32 %v43, 7
    %v45 = vsub.s32 1, %v44
    %v46 = vrot.slane %v37, %v45
    %v47 = vcombine.low %v42, %v46
    %v49 = vunpack.c.l.s4 1983009808
    %v50 = vunpack.c.0.s8 %v49
    %v51 = vlaneseq
    %v52 = vshrl.u32 %v51, 7
    %v53 = vsub.s32 %v50, %v52
    %v54 = vrot.slane %v47, %v53
    %v56 = vadd.f32 %v36, %v54
    %57 = vst [vmem:[#allocation7] sm:$0xf] %v56
    // Predicated region
    $region18: #{tpu_custom_call.1} parent=1 // pred_check
      _
    $region19: #{tpu_custom_call.1} parent=1 // pred_check_branch
      %59 = sbr.rel (0) target = $region21
    $region20: #{tpu_custom_call.1} parent=1 // pred_region
      %s61 = ssub.s32 64, 64
      %62 = vsyncadd [#allocation4], %s61
      %s64 = sshll.u32 [#allocation7], 4
      %s65 = int_to_ptr.vmem [resolvable:$true] %s64
      %67 = dma.vmem_to_hbm [thread:$0]  %s65, 64, %s2, [#allocation4]
    $region21: #{tpu_custom_call.1} parent=1 // pred_fallthru
      _
    // Predicated region
    $region22: #{tpu_custom_call.1} parent=1 // pred_check
      _
    $region23: #{tpu_custom_call.1} parent=1 // pred_check_branch
      %69 = sbr.rel (0) target = $region25
    $region24: #{tpu_custom_call.1} parent=1 // pred_region
      %70 = dma.done [#allocation4], 64
    $region25: #{tpu_custom_call.1} parent=1 // pred_fallthru
      _
    %71 = vsyncpa [#allocation3], 1
    %72 = vsyncpa [#allocation6], 1
    %73 = vsyncpa [#allocation4], 1

</llo_original>
